<compile_context>
chip_gen: v5e
topology: v5e:2x2
jax: 0.10.0
libtpu: 0.0.40
codegen_flags: <defaults>
</compile_context>

<pallas_src>
import jax
import jax.numpy as jnp
from jax.experimental import pallas as pl
from jax.experimental.pallas import tpu as pltpu

LANE = 128
SUBLANE = 8


def _round_up(n, m):
    return ((n + m - 1) // m) * m


def _pad2(a, rows, cols):
    r, c = a.shape
    return jnp.pad(a, ((0, rows - r), (0, cols - c)))


def latent_encode_kernel(x_ref, zb_ref,
                         w0_ref, b0_ref, w1v_ref, wv2_ref, bf_ref,
                         out_ref):
    # encoder layer 0: h = relu(x @ W0 + b0)
    #   x cast to the matmul compute dtype in-kernel (activations arrive in
    #   native f32); f32 MXU accumulation; f32 bias+ReLU epilogue (v5e-safe),
    #   then a single cast feeding the next dot.
    h = jnp.dot(x_ref[...].astype(w0_ref.dtype), w0_ref[...],
                preferred_element_type=jnp.float32)
    h = jnp.maximum(h + b0_ref[...], 0.0).astype(w1v_ref.dtype)

    # Fused encoder layer 1 + V (affine-affine fusion done wrapper-side):
    #   out = h @ (W1 @ Wv1) + z_base @ Wv2 + (b1 @ Wv1 + bv)
    out = jnp.dot(h, w1v_ref[...], preferred_element_type=jnp.float32)
    out += jnp.dot(zb_ref[...].astype(wv2_ref.dtype), wv2_ref[...],
                   preferred_element_type=jnp.float32)
    out += bf_ref[...]

    out_ref[...] = out.astype(out_ref.dtype)


def prepare_latent_encode_params(params, *, compute_dtype=jnp.bfloat16):
    """One-time parameter prep: fuse W1·Wv1, pad to lane width, cast.

    Call once and cache; `latent_encode` takes the prepped dict so no weight
    padding/casting/fusion happens on the per-call path.
    """
    d_in, h = params["w0"].shape
    l = params["w1"].shape[1]
    hp = _round_up(h, LANE)
    lp = _round_up(l, LANE)

    # Algebraic fusion (valid because both stages are affine — no nonlinearity
    # between encoder layer 1 and V in this instantiation):
    #   z = h1 @ W1 + b1 ; out = z @ Wv1 + zb @ Wv2 + bv
    #   => out = h1 @ (W1 @ Wv1) + zb @ Wv2 + (b1 @ Wv1 + bv)
    w1v = params["w1"] @ params["wv1"]
    b_fused = params["b1"] @ params["wv1"] + params["bv"]

    return {
        "d_in": d_in, "l": l, "hp": hp, "lp": lp,
        # K dims left unpadded (activations arrive unpadded); output dims
        # zero-padded to 128 lanes so every store / next-dot operand is
        # lane-dense. Zero padding is exact for every dot product.
        "w0":  _pad2(params["w0"], d_in, hp).astype(compute_dtype),
        "b0":  _pad2(params["b0"], 1, hp).astype(jnp.float32),
        "w1v": _pad2(w1v, hp, lp).astype(compute_dtype),
        "wv2": _pad2(params["wv2"], l, lp).astype(compute_dtype),
        "bf":  _pad2(b_fused, 1, lp).astype(jnp.float32),
    }


def latent_encode(x, z_base, prepped, *, tile_b=1024, out_dtype=None,
                  return_padded=False):
    B, d_in = x.shape
    assert d_in == prepped["d_in"]
    assert z_base.shape == (B, prepped["l"])
    l, lp = prepped["l"], prepped["lp"]
    if out_dtype is None:
        out_dtype = x.dtype

    # Batch tiling: pad B to a sublane-aligned multiple of the tile so ragged
    # batches work; one grid step for small batches, <= tile_b rows per step
    # otherwise (weights use a constant block index -> stay VMEM-resident).
    tb = min(_round_up(B, SUBLANE), tile_b)
    Bp = _round_up(B, tb)
    if Bp != B:
        x = jnp.pad(x, ((0, Bp - B), (0, 0)))
        z_base = jnp.pad(z_base, ((0, Bp - B), (0, 0)))
    grid = (Bp // tb,)

    def act_spec(ncols):
        return pl.BlockSpec((tb, ncols), lambda i: (i, 0))

    def weight_spec(shape):
        # Constant block index -> weight tile resident across all grid steps.
        # TODO(synk): at production weight sizes add pipeline_mode=pl.Buffered(1)
        # here and re-derive the tile budget against 64 MiB VMEM on v7x.
        return pl.BlockSpec(shape, lambda i: (0, 0))

    out_padded = pl.pallas_call(
        latent_encode_kernel,
        out_shape=jax.ShapeDtypeStruct((Bp, lp), out_dtype),
        grid_spec=pltpu.PrefetchScalarGridSpec(
            num_scalar_prefetch=0,
            grid=grid,
            in_specs=[
                act_spec(d_in),                       # x        (tb, D_in)
                act_spec(l),                          # z_base   (tb, L)
                weight_spec(prepped["w0"].shape),     # W0       (D_in, Hp)
                weight_spec(prepped["b0"].shape),     # b0       (1, Hp)
                weight_spec(prepped["w1v"].shape),    # W1@Wv1   (Hp, Lp)
                weight_spec(prepped["wv2"].shape),    # Wv2      (L, Lp)
                weight_spec(prepped["bf"].shape),     # b1@Wv1+bv (1, Lp)
            ],
            out_specs=act_spec(lp),                   # lane-dense (tb, 128k)
        ),
        compiler_params=pltpu.CompilerParams(
            dimension_semantics=("parallel",)),
    )(x, z_base, prepped["w0"], prepped["b0"], prepped["w1v"],
      prepped["wv2"], prepped["bf"])

    if return_padded:
        return out_padded          # consumer accepts the (Bp, Lp) slab directly
    return out_padded[:B, :l]


def reference(x, z_base, p):
    h = jnp.maximum(x @ p["w0"] + p["b0"], 0.0)
    z = h @ p["w1"] + p["b1"]
    return z @ p["wv1"] + z_base @ p["wv2"] + p["bv"]


if __name__ == "__main__":
    B, D_in, H, L = 16, 32, 64, 16

    key = jax.random.PRNGKey(0)
    keys = jax.random.split(key, 9)

    params = {
        "w0":  jax.random.normal(keys[0], (D_in, H), jnp.float32) * 0.1,
        "b0":  jax.random.normal(keys[1], (1, H), jnp.float32) * 0.1,
        "w1":  jax.random.normal(keys[2], (H, L), jnp.float32) * 0.1,
        "b1":  jax.random.normal(keys[3], (1, L), jnp.float32) * 0.1,
        "wv1": jax.random.normal(keys[4], (L, L), jnp.float32) * 0.1,
        "wv2": jax.random.normal(keys[5], (L, L), jnp.float32) * 0.1,
        "bv":  jax.random.normal(keys[6], (1, L), jnp.float32) * 0.1,
    }

    x = jax.random.normal(keys[7], (B, D_in), jnp.float32)
    z_base = jax.random.normal(keys[8], (B, L), jnp.float32)

    ref = reference(x, z_base, params)

    # f32 matmul path — tight check against the pure-JAX reference.
    prep_f32 = prepare_latent_encode_params(params, compute_dtype=jnp.float32)
    out_f32 = jax.block_until_ready(latent_encode(x, z_base, prep_f32))
    assert out_f32.shape == (B, L)
    assert jnp.allclose(out_f32, ref, atol=1e-3, rtol=1e-3)

    # bf16 matmul path (recommended on v6e/v7x) — f32 accumulation/epilogue,
    # looser tolerance for the bf16 operand rounding.
    prep_bf16 = prepare_latent_encode_params(params, compute_dtype=jnp.bfloat16)
    out_bf16 = jax.block_until_ready(latent_encode(x, z_base, prep_bf16))
    assert out_bf16.shape == (B, L)
    assert jnp.allclose(out_bf16, ref, atol=5e-2, rtol=5e-2)

    print("KERNEL_OK")
</pallas_src>

<mosaic_0001>
module attributes {stable_mosaic.version = 11 : i64} {
  func.func @latent_encode_kernel(%arg0: i32, %arg1: memref<16x32xf32, #tpu.memory_space<vmem>>, %arg2: memref<16x16xf32, #tpu.memory_space<vmem>>, %arg3: memref<32x128xf32, #tpu.memory_space<vmem>>, %arg4: memref<1x128xf32, #tpu.memory_space<vmem>>, %arg5: memref<128x128xf32, #tpu.memory_space<vmem>>, %arg6: memref<16x128xf32, #tpu.memory_space<vmem>>, %arg7: memref<1x128xf32, #tpu.memory_space<vmem>>, %arg8: memref<16x128xf32, #tpu.memory_space<vmem>>) attributes {dimension_semantics = [#tpu.dimension_semantics<parallel>], iteration_bounds = array<i64: 1>, scalar_prefetch = 0 : i64, scratch_operands = 0 : i64, tpu.core_type = #tpu.core_type<tc>, window_params = [{transform_indices = @transform_0, window_bounds = array<i64: 16, 32>}, {transform_indices = @transform_1, window_bounds = array<i64: 16, 16>}, {pipeline_mode = #tpu.pipeline_mode<synchronous>, transform_indices = @transform_2, window_bounds = array<i64: 32, 128>}, {pipeline_mode = #tpu.pipeline_mode<synchronous>, transform_indices = @transform_3, window_bounds = array<i64: 1, 128>}, {pipeline_mode = #tpu.pipeline_mode<synchronous>, transform_indices = @transform_4, window_bounds = array<i64: 128, 128>}, {pipeline_mode = #tpu.pipeline_mode<synchronous>, transform_indices = @transform_5, window_bounds = array<i64: 16, 128>}, {pipeline_mode = #tpu.pipeline_mode<synchronous>, transform_indices = @transform_6, window_bounds = array<i64: 1, 128>}, {transform_indices = @transform_7, window_bounds = array<i64: 16, 128>}]} {
    %c0 = arith.constant 0 : index
    %c0_0 = arith.constant 0 : index
    %0 = vector.load %arg1[%c0, %c0_0] : memref<16x32xf32, #tpu.memory_space<vmem>>, vector<16x32xf32>
    %c0_1 = arith.constant 0 : index
    %c0_2 = arith.constant 0 : index
    %1 = vector.load %arg3[%c0_1, %c0_2] : memref<32x128xf32, #tpu.memory_space<vmem>>, vector<32x128xf32>
    %cst = arith.constant dense<0.000000e+00> : vector<16x128xf32>
    %2 = tpu.matmul %0, %1, %cst {dimension_numbers = #tpu.dot_dimension_numbers<[1], [0], [0], [1], [0, 0, 1, 1], [], []>} : vector<16x32xf32>, vector<32x128xf32>, vector<16x128xf32> -> vector<16x128xf32>
    %c0_3 = arith.constant 0 : index
    %c0_4 = arith.constant 0 : index
    %3 = vector.load %arg4[%c0_3, %c0_4] : memref<1x128xf32, #tpu.memory_space<vmem>>, vector<1x128xf32>
    %4 = vector.broadcast %3 : vector<1x128xf32> to vector<16x128xf32>
    %5 = arith.addf %2, %4 : vector<16x128xf32>
    %cst_5 = arith.constant 0.000000e+00 : f32
    %6 = vector.broadcast %cst_5 : f32 to vector<16x128xf32>
    %7 = arith.maximumf %5, %6 : vector<16x128xf32>
    %c0_6 = arith.constant 0 : index
    %c0_7 = arith.constant 0 : index
    %8 = vector.load %arg5[%c0_6, %c0_7] : memref<128x128xf32, #tpu.memory_space<vmem>>, vector<128x128xf32>
    %cst_8 = arith.constant dense<0.000000e+00> : vector<16x128xf32>
    %9 = tpu.matmul %7, %8, %cst_8 {dimension_numbers = #tpu.dot_dimension_numbers<[1], [0], [0], [1], [0, 0, 1, 1], [], []>} : vector<16x128xf32>, vector<128x128xf32>, vector<16x128xf32> -> vector<16x128xf32>
    %c0_9 = arith.constant 0 : index
    %c0_10 = arith.constant 0 : index
    %10 = vector.load %arg2[%c0_9, %c0_10] : memref<16x16xf32, #tpu.memory_space<vmem>>, vector<16x16xf32>
    %c0_11 = arith.constant 0 : index
    %c0_12 = arith.constant 0 : index
    %11 = vector.load %arg6[%c0_11, %c0_12] : memref<16x128xf32, #tpu.memory_space<vmem>>, vector<16x128xf32>
    %cst_13 = arith.constant dense<0.000000e+00> : vector<16x128xf32>
    %12 = tpu.matmul %10, %11, %cst_13 {dimension_numbers = #tpu.dot_dimension_numbers<[1], [0], [0], [1], [0, 0, 1, 1], [], []>} : vector<16x16xf32>, vector<16x128xf32>, vector<16x128xf32> -> vector<16x128xf32>
    %13 = arith.addf %9, %12 : vector<16x128xf32>
    %c0_14 = arith.constant 0 : index
    %c0_15 = arith.constant 0 : index
    %14 = vector.load %arg7[%c0_14, %c0_15] : memref<1x128xf32, #tpu.memory_space<vmem>>, vector<1x128xf32>
    %15 = vector.broadcast %14 : vector<1x128xf32> to vector<16x128xf32>
    %16 = arith.addf %13, %15 : vector<16x128xf32>
    %c0_16 = arith.constant 0 : index
    %c0_17 = arith.constant 0 : index
    %17 = vector.load %arg8[%c0_16, %c0_17] : memref<16x128xf32, #tpu.memory_space<vmem>>, vector<16x128xf32>
    tpu.vector_store %arg8[%c0_16, %c0_17], %16 {strides = array<i32>} : memref<16x128xf32, #tpu.memory_space<vmem>>, vector<16x128xf32>,
    return
  }
  func.func @transform_0(%arg0: i32) -> (i32, i32) {
    %c0_i32 = arith.constant 0 : i32
    %c0_i32_0 = arith.constant 0 : i32
    return %arg0, %c0_i32 : i32, i32
  }
  func.func @transform_1(%arg0: i32) -> (i32, i32) {
    %c0_i32 = arith.constant 0 : i32
    %c0_i32_0 = arith.constant 0 : i32
    return %arg0, %c0_i32 : i32, i32
  }
  func.func @transform_2(%arg0: i32) -> (i32, i32) {
    %c0_i32 = arith.constant 0 : i32
    %c0_i32_0 = arith.constant 0 : i32
    %c0_i32_1 = arith.constant 0 : i32
    return %c0_i32, %c0_i32_0 : i32, i32
  }
  func.func @transform_3(%arg0: i32) -> (i32, i32) {
    %c0_i32 = arith.constant 0 : i32
    %c0_i32_0 = arith.constant 0 : i32
    %c0_i32_1 = arith.constant 0 : i32
    return %c0_i32, %c0_i32_0 : i32, i32
  }
  func.func @transform_4(%arg0: i32) -> (i32, i32) {
    %c0_i32 = arith.constant 0 : i32
    %c0_i32_0 = arith.constant 0 : i32
    %c0_i32_1 = arith.constant 0 : i32
    return %c0_i32, %c0_i32_0 : i32, i32
  }
  func.func @transform_5(%arg0: i32) -> (i32, i32) {
    %c0_i32 = arith.constant 0 : i32
    %c0_i32_0 = arith.constant 0 : i32
    %c0_i32_1 = arith.constant 0 : i32
    return %c0_i32, %c0_i32_0 : i32, i32
  }
  func.func @transform_6(%arg0: i32) -> (i32, i32) {
    %c0_i32 = arith.constant 0 : i32
    %c0_i32_0 = arith.constant 0 : i32
    %c0_i32_1 = arith.constant 0 : i32
    return %c0_i32, %c0_i32_0 : i32, i32
  }
  func.func @transform_7(%arg0: i32) -> (i32, i32) {
    %c0_i32 = arith.constant 0 : i32
    %c0_i32_0 = arith.constant 0 : i32
    return %arg0, %c0_i32 : i32, i32
  }
}

</mosaic_0001>

<llo_original>
// kernel: tpu_custom_call.1
$region0: #{tpu_custom_call.1}
  #allocation0 [shape = 'u32[]', space=smem, size = 0x4, offset = 0x4, fixed_abs, tag = 'smem constant byte address 0x4 - core index']
  #allocation1 [shape = 'u32[72,128]{1,0:T(1,128)}', space=vmem, size = 0x9000, scoped, tag = 'internal scratch']
  %s0 = inlined_call_operand.hbm [shape: f32[16,32], index: 0, kind: input, shape index: {}]
  %s1 = inlined_call_operand.hbm [shape: f32[16,16], index: 1, kind: input, shape index: {}]
  %s2 = inlined_call_operand.hbm [shape: f32[32,128], index: 2, kind: input, shape index: {}]
  %s3 = inlined_call_operand.vmem [shape: f32[1,128], index: 3, kind: input, shape index: {}]
  %s4 = inlined_call_operand.hbm [shape: f32[128,128], index: 4, kind: input, shape index: {}]
  %s5 = inlined_call_operand.hbm [shape: f32[16,128], index: 5, kind: input, shape index: {}]
  %s6 = inlined_call_operand.vmem [shape: f32[1,128], index: 6, kind: input, shape index: {}]
  %s7 = inlined_call_operand.hbm [shape: f32[16,128], index: 7, kind: output, shape index: {}]
  %s8 = sld [smem:[#allocation0]]
  $region58: #{tpu_custom_call.1} parent=0
    _
  %s10 = ssub.s32 1, %s8
  %s11 = scalar_select 0, %s10, %s8
  $region1: #{tpu_custom_call.1} parent=0
    #allocation2 [shape = 'u8[8192]{0}', space=vmem, size = 0x2000, scoped, tag = 'input window, operand 0, single buffered']
    #allocation3 [shape = 's32[1]{0}', space=sflag, size = 0x4, scoped, tag = 'scoped memory for tpu_custom_call.1']
    #allocation4 [shape = 's32[1]{0}', space=sflag, size = 0x4, scoped, tag = 'scoped memory for tpu_custom_call.1']
    #allocation5 [shape = 'u8[8192]{0}', space=vmem, size = 0x2000, scoped, tag = 'input window, operand 1, single buffered']
    #allocation6 [shape = 's32[1]{0}', space=sflag, size = 0x4, scoped, tag = 'scoped memory for tpu_custom_call.1']
    #allocation7 [shape = 'u8[16384]{0}', space=vmem, size = 0x4000, scoped, tag = 'input window, operand 2, single buffered']
    #allocation8 [shape = 'u8[65536]{0}', space=vmem, size = 0x10000, scoped, tag = 'input window, operand 4, single buffered']
    #allocation9 [shape = 's32[1]{0}', space=sflag, size = 0x4, scoped, tag = 'scoped memory for tpu_custom_call.1']
    #allocation10 [shape = 'u8[8192]{0}', space=vmem, size = 0x2000, scoped, tag = 'input window, operand 5, single buffered']
    #allocation11 [shape = 'u8[8192]{0}', space=vmem, size = 0x2000, scoped, tag = 'output window, operand 0, single buffered']
    %12 = vsyncpa [#allocation3], 0
    %13 = vsyncpa [#allocation6], 0
    %14 = vsyncpa [#allocation9], 0
    %15 = vsyncpa [#allocation4], 0
    // Predicated region
    $region2: #{tpu_custom_call.1} parent=1 // pred_check
      _
    $region3: #{tpu_custom_call.1} parent=1 // pred_check_branch
      %17 = sbr.rel (0) target = $region5
    $region4: #{tpu_custom_call.1} parent=1 // pred_region
      %19 = vsyncadd [#allocation3], 0
      %s20 = sshll.u32 %s0, 4
      %s21 = int_to_ptr.hbm [resolvable:$true] %s20
      %s22 = sshll.u32 [#allocation2], 4
      %s23 = int_to_ptr.vmem [resolvable:$true] %s22
      %28 = dma.hbm_to_vmem [thread:$0]  %s21, 256, %s23, [#allocation3], 128, 128, 8
    $region5: #{tpu_custom_call.1} parent=1 // pred_fallthru
      _
    // Predicated region
    $region6: #{tpu_custom_call.1} parent=1 // pred_check
      _
    $region7: #{tpu_custom_call.1} parent=1 // pred_check_branch
      %30 = sbr.rel (0) target = $region9
    $region8: #{tpu_custom_call.1} parent=1 // pred_region
      %32 = vsyncadd [#allocation6], 0
      %s33 = sshll.u32 %s1, 4
      %s34 = int_to_ptr.hbm [resolvable:$true] %s33
      %s35 = sshll.u32 [#allocation5], 4
      %s36 = int_to_ptr.vmem [resolvable:$true] %s35
      %41 = dma.hbm_to_vmem [thread:$0]  %s34, 256, %s36, [#allocation6], 128, 128, 8
    $region9: #{tpu_custom_call.1} parent=1 // pred_fallthru
      _
    // Predicated region
    $region10: #{tpu_custom_call.1} parent=1 // pred_check
      _
    $region11: #{tpu_custom_call.1} parent=1 // pred_check_branch
      %43 = sbr.rel (0) target = $region13
    $region12: #{tpu_custom_call.1} parent=1 // pred_region
      %45 = vsyncadd [#allocation6], 0
      %s46 = sshll.u32 %s2, 4
      %s47 = int_to_ptr.hbm [resolvable:$true] %s46
      %s48 = sshll.u32 [#allocation7], 4
      %s49 = int_to_ptr.vmem [resolvable:$true] %s48
      %54 = dma.hbm_to_vmem [thread:$0]  %s47, 512, %s49, [#allocation6], 128, 128, 8
    $region13: #{tpu_custom_call.1} parent=1 // pred_fallthru
      _
    // Predicated region
    $region14: #{tpu_custom_call.1} parent=1 // pred_check
      _
    $region15: #{tpu_custom_call.1} parent=1 // pred_check_branch
      %56 = sbr.rel (0) target = $region17
    $region16: #{tpu_custom_call.1} parent=1 // pred_region
      _
    $region17: #{tpu_custom_call.1} parent=1 // pred_fallthru
      _
    // Predicated region
    $region18: #{tpu_custom_call.1} parent=1 // pred_check
      _
    $region19: #{tpu_custom_call.1} parent=1 // pred_check_branch
      %58 = sbr.rel (0) target = $region21
    $region20: #{tpu_custom_call.1} parent=1 // pred_region
      %60 = vsyncadd [#allocation9], 0
      %s61 = sshll.u32 %s4, 4
      %s62 = int_to_ptr.hbm [resolvable:$true] %s61
      %s63 = sshll.u32 [#allocation8], 4
      %s64 = int_to_ptr.vmem [resolvable:$true] %s63
      %69 = dma.hbm_to_vmem [thread:$0]  %s62, 2048, %s64, [#allocation9], 128, 128, 8
    $region21: #{tpu_custom_call.1} parent=1 // pred_fallthru
      _
    // Predicated region
    $region22: #{tpu_custom_call.1} parent=1 // pred_check
      _
    $region23: #{tpu_custom_call.1} parent=1 // pred_check_branch
      %71 = sbr.rel (0) target = $region25
    $region24: #{tpu_custom_call.1} parent=1 // pred_region
      %73 = vsyncadd [#allocation9], 0
      %s74 = sshll.u32 %s5, 4
      %s75 = int_to_ptr.hbm [resolvable:$true] %s74
      %s76 = sshll.u32 [#allocation10], 4
      %s77 = int_to_ptr.vmem [resolvable:$true] %s76
      %82 = dma.hbm_to_vmem [thread:$0]  %s75, 256, %s77, [#allocation9], 128, 128, 8
    $region25: #{tpu_custom_call.1} parent=1 // pred_fallthru
      _
    // Predicated region
    $region26: #{tpu_custom_call.1} parent=1 // pred_check
      _
    $region27: #{tpu_custom_call.1} parent=1 // pred_check_branch
      %84 = sbr.rel (0) target = $region29
    $region28: #{tpu_custom_call.1} parent=1 // pred_region
      _
    $region29: #{tpu_custom_call.1} parent=1 // pred_fallthru
      _
    // Predicated region
    $region30: #{tpu_custom_call.1} parent=1 // pred_check
      _
    $region31: #{tpu_custom_call.1} parent=1 // pred_check_branch
      %86 = sbr.rel (0) target = $region33
    $region32: #{tpu_custom_call.1} parent=1 // pred_region
      %88 = dma.done [#allocation3], 256
    $region33: #{tpu_custom_call.1} parent=1 // pred_fallthru
      _
    // Predicated region
    $region34: #{tpu_custom_call.1} parent=1 // pred_check
      _
    $region35: #{tpu_custom_call.1} parent=1 // pred_check_branch
      %90 = sbr.rel (0) target = $region37
    $region36: #{tpu_custom_call.1} parent=1 // pred_region
      %92 = dma.done [#allocation6], 256
    $region37: #{tpu_custom_call.1} parent=1 // pred_fallthru
      _
    // Predicated region
    $region38: #{tpu_custom_call.1} parent=1 // pred_check
      _
    $region39: #{tpu_custom_call.1} parent=1 // pred_check_branch
      %94 = sbr.rel (0) target = $region41
    $region40: #{tpu_custom_call.1} parent=1 // pred_region
      %96 = dma.done [#allocation6], 512
    $region41: #{tpu_custom_call.1} parent=1 // pred_fallthru
      _
    // Predicated region
    $region42: #{tpu_custom_call.1} parent=1 // pred_check
      _
    $region43: #{tpu_custom_call.1} parent=1 // pred_check_branch
      %98 = sbr.rel (0) target = $region45
    $region44: #{tpu_custom_call.1} parent=1 // pred_region
      %100 = dma.done [#allocation9], 2048
    $region45: #{tpu_custom_call.1} parent=1 // pred_fallthru
      _
    // Predicated region
    $region46: #{tpu_custom_call.1} parent=1 // pred_check
      _
    $region47: #{tpu_custom_call.1} parent=1 // pred_check_branch
      %102 = sbr.rel (0) target = $region49
    $region48: #{tpu_custom_call.1} parent=1 // pred_region
      %104 = dma.done [#allocation9], 256
    $region49: #{tpu_custom_call.1} parent=1 // pred_fallthru
      _
    %v105 = vld [vmem:[#allocation2] sm:$0xff]
    %v106 = vld [vmem:[#allocation2 + $0x8] sm:$0xff]
    %v107 = vld [vmem:[#allocation7] sm:$0xff]
    %v108 = vld [vmem:[#allocation7 + $0x8] sm:$0xff]
    %v109 = vld [vmem:[#allocation7 + $0x10] sm:$0xff]
    %v110 = vld [vmem:[#allocation7 + $0x18] sm:$0xff]
    %v111 = vld [vmem:[%s3] sm:$0x1]
    %v113 = vperm.slane %v111, 0
    %vm115 = vcmask 261120
    %v117 = vsel %vm115, %v105, 0
    %v120 = vsel %vm115, %v106, 0
    %122 = vmatpush.msra.mxu0 0.0
    %123 = vmatpush.msra.mxu0 0.0
    %124 = vmatpush.msra.mxu0 0.0
    %125 = vmatpush.msra.mxu0 0.0
    %126 = vmatpush.msra.mxu0 0.0
    %127 = vmatpush.msra.mxu0 0.0
    %128 = vmatpush.msra.mxu0 0.0
    %129 = vmatpush.msra.mxu0 0.0
    %130 = vmatpush.msra.mxu0 0.0
    %131 = vmatpush.msra.mxu0 0.0
    %132 = vmatpush.msra.mxu0 0.0
    %133 = vmatpush.msra.mxu0 0.0
    %134 = vmatpush.msra.mxu0 %v110
    %135 = vmatpush.msra.mxu0 %v109
    %136 = vmatpush.msra.mxu0 %v108
    %137 = vmatpush.msra.mxu0 %v107
    %138 = vmatmul.f32.gmra.mxu0 %v117
    %v139 = vpop.f32.mrf.mxu0
    %v140 = vadd.f32 %v113, %v139
    %141 = vmatmul.f32.gmra.mxu0 %v120
    %v142 = vpop.f32.mrf.mxu0
    %v143 = vadd.f32 %v113, %v142
    %144 = vdwg.mxu0
    %v145 = vmax.f32 %v140, 0.0
    %v146 = vmax.f32 %v143, 0.0
    %v147 = vld [vmem:[#allocation8] sm:$0xff]
    %v148 = vld [vmem:[#allocation8 + $0x8] sm:$0xff]
    %v149 = vld [vmem:[#allocation8 + $0x10] sm:$0xff]
    %v150 = vld [vmem:[#allocation8 + $0x18] sm:$0xff]
    %v151 = vld [vmem:[#allocation8 + $0x20] sm:$0xff]
    %v152 = vld [vmem:[#allocation8 + $0x28] sm:$0xff]
    %v153 = vld [vmem:[#allocation8 + $0x30] sm:$0xff]
    %v154 = vld [vmem:[#allocation8 + $0x38] sm:$0xff]
    %v155 = vld [vmem:[#allocation8 + $0x40] sm:$0xff]
    %v156 = vld [vmem:[#allocation8 + $0x48] sm:$0xff]
    %v157 = vld [vmem:[#allocation8 + $0x50] sm:$0xff]
    %v158 = vld [vmem:[#allocation8 + $0x58] sm:$0xff]
    %v159 = vld [vmem:[#allocation8 + $0x60] sm:$0xff]
    %v160 = vld [vmem:[#allocation8 + $0x68] sm:$0xff]
    %v161 = vld [vmem:[#allocation8 + $0x70] sm:$0xff]
    %v162 = vld [vmem:[#allocation8 + $0x78] sm:$0xff]
    %v163 = vld [vmem:[#allocation5] sm:$0xff]
    %v164 = vld [vmem:[#allocation5 + $0x8] sm:$0xff]
    %v165 = vld [vmem:[#allocation10] sm:$0xff]
    %v166 = vld [vmem:[#allocation10 + $0x8] sm:$0xff]
    %vm167 = vcmask 130048
    %v169 = vsel %vm167, %v163, 0
    %v172 = vsel %vm167, %v164, 0
    %174 = vmatpush.msra.mxu0 0.0
    %175 = vmatpush.msra.mxu0 0.0
    %176 = vmatpush.msra.mxu0 0.0
    %177 = vmatpush.msra.mxu0 0.0
    %178 = vmatpush.msra.mxu0 0.0
    %179 = vmatpush.msra.mxu0 0.0
    %180 = vmatpush.msra.mxu0 0.0
    %181 = vmatpush.msra.mxu0 0.0
    %182 = vmatpush.msra.mxu0 0.0
    %183 = vmatpush.msra.mxu0 0.0
    %184 = vmatpush.msra.mxu0 0.0
    %185 = vmatpush.msra.mxu0 0.0
    %186 = vmatpush.msra.mxu0 0.0
    %187 = vmatpush.msra.mxu0 0.0
    %188 = vmatpush.msra.mxu0 %v166
    %189 = vmatpush.msra.mxu0 %v165
    %190 = vmatmul.f32.gmra.mxu0 %v169
    %v191 = vpop.f32.mrf.mxu0
    %v192 = vadd.f32 0.0, %v191
    %193 = vmatmul.f32.gmra.mxu0 %v172
    %v194 = vpop.f32.mrf.mxu0
    %v195 = vadd.f32 0.0, %v194
    %196 = vdwg.mxu0
    %197 = vmatpush.msra.mxu0 %v162
    %198 = vmatpush.msra.mxu0 %v161
    %199 = vmatpush.msra.mxu0 %v160
    %200 = vmatpush.msra.mxu0 %v159
    %201 = vmatpush.msra.mxu0 %v158
    %202 = vmatpush.msra.mxu0 %v157
    %203 = vmatpush.msra.mxu0 %v156
    %204 = vmatpush.msra.mxu0 %v155
    %205 = vmatpush.msra.mxu0 %v154
    %206 = vmatpush.msra.mxu0 %v153
    %207 = vmatpush.msra.mxu0 %v152
    %208 = vmatpush.msra.mxu0 %v151
    %209 = vmatpush.msra.mxu0 %v150
    %210 = vmatpush.msra.mxu0 %v149
    %211 = vmatpush.msra.mxu0 %v148
    %212 = vmatpush.msra.mxu0 %v147
    %213 = vmatmul.f32.gmra.mxu0 %v145
    %v214 = vpop.f32.mrf.mxu0
    %v215 = vadd.f32 %v192, %v214
    %216 = vmatmul.f32.gmra.mxu0 %v146
    %v217 = vpop.f32.mrf.mxu0
    %v218 = vadd.f32 %v195, %v217
    %219 = vdwg.mxu0
    %v220 = vld [vmem:[%s6] sm:$0x1]
    %v222 = vperm.slane %v220, 0
    %v224 = vadd.f32 %v215, %v222
    %v225 = vadd.f32 %v218, %v222
    %226 = vst [vmem:[#allocation11] sm:$0xff] %v224
    %227 = vst [vmem:[#allocation11 + $0x8] sm:$0xff] %v225
    // Predicated region
    $region50: #{tpu_custom_call.1} parent=1 // pred_check
      _
    $region51: #{tpu_custom_call.1} parent=1 // pred_check_branch
      %229 = sbr.rel (0) target = $region53
    $region52: #{tpu_custom_call.1} parent=1 // pred_region
      %231 = vsyncadd [#allocation4], 0
      %s232 = sshll.u32 [#allocation11], 4
      %s233 = int_to_ptr.vmem [resolvable:$true] %s232
      %s234 = sshll.u32 %s7, 4
      %s235 = int_to_ptr.hbm [resolvable:$true] %s234
      %240 = dma.vmem_to_hbm [thread:$0]  %s233, 256, %s235, [#allocation4], 128, 128, 8
    $region53: #{tpu_custom_call.1} parent=1 // pred_fallthru
      _
    // Predicated region
    $region54: #{tpu_custom_call.1} parent=1 // pred_check
      _
    $region55: #{tpu_custom_call.1} parent=1 // pred_check_branch
      %242 = sbr.rel (0) target = $region57
    $region56: #{tpu_custom_call.1} parent=1 // pred_region
      %244 = dma.done [#allocation4], 256
    $region57: #{tpu_custom_call.1} parent=1 // pred_fallthru
      _
    %245 = vsyncpa [#allocation3], 1
    %246 = vsyncpa [#allocation6], 1
    %247 = vsyncpa [#allocation9], 1
    %248 = vsyncpa [#allocation4], 1

</llo_original>
